<compile_context>
chip_gen: v7x
topology: tpu7x:2x2x1
jax: 0.10.0
libtpu: 0.0.40
codegen_flags: <defaults>
</compile_context>

<pallas_src>
import jax
import jax.numpy as jnp
from jax.experimental import pallas as pl
from jax.experimental.pallas import tpu as pltpu


def se_kernel(x_ref, w1t_ref, b1_ref, w2t_ref, b2_ref, o_ref):
    # x_ref / o_ref: (C, Tb, S) block (N dim squeezed away by the BlockSpec).
    # w1t: (Cr, C), b1: (Cr, 1), w2t: (C, Cr), b2: (C, 1).

    # Squeeze: mean over the spatial (lane) axis -> (C, Tb).
    pooled = jnp.mean(x_ref[...].astype(jnp.float32), axis=-1)

    # Excite: fc1 -> relu -> fc2 -> sigmoid, all on the tiny pooled tile.
    # Weights arrive pre-transposed so no in-kernel transposes are needed.
    h = jnp.dot(w1t_ref[...], pooled, preferred_element_type=jnp.float32)
    h = jnp.maximum(h + b1_ref[...], 0.0)                     # (Cr, Tb)
    s = jnp.dot(w2t_ref[...], h, preferred_element_type=jnp.float32)
    s = jax.nn.sigmoid(s + b2_ref[...])                       # (C, Tb)

    # Scale: broadcast the per-(c, t) gate over all spatial positions.  The
    # block is re-read from VMEM here (cheap) instead of keeping a block-sized
    # f32 temp alive across the excite math.
    gate = s[:, :, None].astype(o_ref.dtype)                  # (C, Tb, 1)
    o_ref[...] = x_ref[...] * gate


def se_module_pallas(x, w1, b1, w2, b2, *, block_t=None):
    """x: (N, C, T, H, W).  w1: (C, Cr), b1: (Cr,), w2: (Cr, C), b2: (C,)."""
    N, C, T, H, W = x.shape
    Cr = w1.shape[1]
    S = H * W
    itemsize = x.dtype.itemsize

    # Free (contiguous) reshape — no HBM transpose in this layout.
    x_flat = x.reshape(N, C, T, S)

    # Pick a T-block so one (C, Tb, S) slab is ~2 MiB (keeps 2 in- + 2 out-
    # double-buffers well inside scoped VMEM on v5e/v6e/v7x) while honoring
    # the (8, 128) tiling rule: Tb == T or Tb a multiple of 8 that divides T.
    if block_t is None:
        block_t = T
        target_bytes = 2 * 1024 * 1024
        bytes_per_t = C * S * itemsize
        if T % 8 == 0 and T * bytes_per_t > target_bytes:
            cand = max(8, (target_bytes // max(bytes_per_t, 1)) // 8 * 8)
            cand = min(int(cand), T)
            while cand >= 8 and T % cand != 0:
                cand -= 8
            if cand >= 8:
                block_t = int(cand)
    assert T % block_t == 0
    grid = (N, T // block_t)

    # Pre-transpose the tiny weights (wrapper-side, negligible) and shape the
    # biases as columns so they broadcast over the T axis inside the kernel.
    w1t = jnp.transpose(w1)            # (Cr, C)
    w2t = jnp.transpose(w2)            # (C, Cr)
    b1c = b1.reshape(Cr, 1)
    b2c = b2.reshape(C, 1)

    block_bytes = C * block_t * S * itemsize
    vmem_limit = int(min(64 * 1024 * 1024,
                         max(16 * 1024 * 1024, 6 * block_bytes)))

    # The op is HBM-bandwidth bound: ~1 read + 1 write of x; matmuls are tiny.
    cost = pl.CostEstimate(
        flops=int(4 * N * T * C * Cr + 2 * x.size),
        transcendentals=int(N * T * C),
        bytes_accessed=int(2 * x.size * itemsize),
    )

    out_flat = pl.pallas_call(
        se_kernel,
        out_shape=jax.ShapeDtypeStruct((N, C, T, S), x.dtype),
        grid_spec=pltpu.PrefetchScalarGridSpec(
            num_scalar_prefetch=0,
            grid=grid,
            in_specs=[
                pl.BlockSpec((None, C, block_t, S), lambda n, t: (n, 0, t, 0)),
                pl.BlockSpec((Cr, C), lambda n, t: (0, 0)),
                pl.BlockSpec((Cr, 1), lambda n, t: (0, 0)),
                pl.BlockSpec((C, Cr), lambda n, t: (0, 0)),
                pl.BlockSpec((C, 1), lambda n, t: (0, 0)),
            ],
            out_specs=pl.BlockSpec((None, C, block_t, S),
                                   lambda n, t: (n, 0, t, 0)),
        ),
        compiler_params=pltpu.CompilerParams(
            dimension_semantics=("parallel", "parallel"),
            vmem_limit_bytes=vmem_limit,
        ),
        cost_estimate=cost,
        # NOTE: input_output_aliases={0: 0} would halve the HBM footprint when
        # the caller can donate x; left off here because the test reuses x.
    )(x_flat, w1t, b1c, w2t, b2c)

    # Free reshape back to NCDHW.
    return out_flat.reshape(N, C, T, H, W)


def se_module_ref(x, w1, b1, w2, b2):
    # Pure-JAX reference with identical math (NCDHW in/out).
    pooled = jnp.mean(x, axis=(3, 4))                     # (N, C, T)
    pooled = jnp.transpose(pooled, (0, 2, 1))             # (N, T, C)
    h = jnp.maximum(pooled @ w1 + b1, 0.0)                # (N, T, Cr)
    s = jax.nn.sigmoid(h @ w2 + b2)                       # (N, T, C)
    s = jnp.transpose(s, (0, 2, 1))[:, :, :, None, None]  # (N, C, T, 1, 1)
    return x * s


if __name__ == "__main__":
    key = jax.random.PRNGKey(0)
    N, C, T, H, W = 2, 8, 4, 8, 8
    reduction = 2
    Cr = C // reduction

    kx, kw1, kb1, kw2, kb2 = jax.random.split(key, 5)
    x = jax.random.normal(kx, (N, C, T, H, W), dtype=jnp.float32)
    # Deterministic synthetic params (Conv3d 1x1x1 == dense over channels).
    w1 = jax.random.normal(kw1, (C, Cr), dtype=jnp.float32) * 0.1
    b1 = jax.random.normal(kb1, (Cr,), dtype=jnp.float32) * 0.1
    w2 = jax.random.normal(kw2, (Cr, C), dtype=jnp.float32) * 0.1
    b2 = jax.random.normal(kb2, (C,), dtype=jnp.float32) * 0.1

    out = se_module_pallas(x, w1, b1, w2, b2)
    out = jax.block_until_ready(out)

    ref = se_module_ref(x, w1, b1, w2, b2)
    assert out.shape == (N, C, T, H, W)
    assert jnp.allclose(out, ref, atol=1e-5, rtol=1e-5)

    print("KERNEL_OK")
</pallas_src>

<mosaic_0001>
module attributes {stable_mosaic.version = 11 : i64} {
  func.func @se_kernel(%arg0: i32, %arg1: i32, %arg2: memref<1x8x4x64xf32, #tpu.memory_space<vmem>>, %arg3: memref<4x8xf32, #tpu.memory_space<vmem>>, %arg4: memref<4x1xf32, #tpu.memory_space<vmem>>, %arg5: memref<8x4xf32, #tpu.memory_space<vmem>>, %arg6: memref<8x1xf32, #tpu.memory_space<vmem>>, %arg7: memref<1x8x4x64xf32, #tpu.memory_space<vmem>>) attributes {dimension_semantics = [#tpu.dimension_semantics<parallel>, #tpu.dimension_semantics<parallel>], iteration_bounds = array<i64: 2, 1>, scalar_prefetch = 0 : i64, scratch_operands = 0 : i64, tpu.core_type = #tpu.core_type<tc>, window_params = [{transform_indices = @transform_0, window_bounds = array<i64: 1, 8, 4, 64>}, {pipeline_mode = #tpu.pipeline_mode<synchronous>, transform_indices = @transform_1, window_bounds = array<i64: 4, 8>}, {pipeline_mode = #tpu.pipeline_mode<synchronous>, transform_indices = @transform_2, window_bounds = array<i64: 4, 1>}, {pipeline_mode = #tpu.pipeline_mode<synchronous>, transform_indices = @transform_3, window_bounds = array<i64: 8, 4>}, {pipeline_mode = #tpu.pipeline_mode<synchronous>, transform_indices = @transform_4, window_bounds = array<i64: 8, 1>}, {transform_indices = @transform_5, window_bounds = array<i64: 1, 8, 4, 64>}]} {
    %c0 = arith.constant 0 : index
    %c0_0 = arith.constant 0 : index
    %c0_1 = arith.constant 0 : index
    %c0_2 = arith.constant 0 : index
    %0 = vector.load %arg2[%c0, %c0_0, %c0_1, %c0_2] : memref<1x8x4x64xf32, #tpu.memory_space<vmem>>, vector<1x8x4x64xf32>
    %1 = vector.shape_cast %0 : vector<1x8x4x64xf32> to vector<8x4x64xf32>
    %cst = arith.constant dense<0.000000e+00> : vector<8x4xf32>
    %2 = vector.multi_reduction <add>, %1, %cst [2] : vector<8x4x64xf32> to vector<8x4xf32>
    %cst_3 = arith.constant 6.400000e+01 : f32
    %3 = vector.broadcast %cst_3 : f32 to vector<8x4xf32>
    %4 = arith.divf %2, %3 : vector<8x4xf32>
    %c0_4 = arith.constant 0 : index
    %c0_5 = arith.constant 0 : index
    %5 = vector.load %arg3[%c0_4, %c0_5] : memref<4x8xf32, #tpu.memory_space<vmem>>, vector<4x8xf32>
    %cst_6 = arith.constant dense<0.000000e+00> : vector<4x4xf32>
    %6 = tpu.matmul %5, %4, %cst_6 {dimension_numbers = #tpu.dot_dimension_numbers<[1], [0], [0], [1], [0, 0, 1, 1], [], []>} : vector<4x8xf32>, vector<8x4xf32>, vector<4x4xf32> -> vector<4x4xf32>
    %c0_7 = arith.constant 0 : index
    %c0_8 = arith.constant 0 : index
    %7 = vector.load %arg4[%c0_7, %c0_8] : memref<4x1xf32, #tpu.memory_space<vmem>>, vector<4x1xf32>
    %8 = vector.broadcast %7 : vector<4x1xf32> to vector<4x4xf32>
    %9 = arith.addf %6, %8 : vector<4x4xf32>
    %cst_9 = arith.constant 0.000000e+00 : f32
    %10 = vector.broadcast %cst_9 : f32 to vector<4x4xf32>
    %11 = arith.maximumf %9, %10 : vector<4x4xf32>
    %c0_10 = arith.constant 0 : index
    %c0_11 = arith.constant 0 : index
    %12 = vector.load %arg5[%c0_10, %c0_11] : memref<8x4xf32, #tpu.memory_space<vmem>>, vector<8x4xf32>
    %cst_12 = arith.constant dense<0.000000e+00> : vector<8x4xf32>
    %13 = tpu.matmul %12, %11, %cst_12 {dimension_numbers = #tpu.dot_dimension_numbers<[1], [0], [0], [1], [0, 0, 1, 1], [], []>} : vector<8x4xf32>, vector<4x4xf32>, vector<8x4xf32> -> vector<8x4xf32>
    %c0_13 = arith.constant 0 : index
    %c0_14 = arith.constant 0 : index
    %14 = vector.load %arg6[%c0_13, %c0_14] : memref<8x1xf32, #tpu.memory_space<vmem>>, vector<8x1xf32>
    %15 = vector.broadcast %14 : vector<8x1xf32> to vector<8x4xf32>
    %16 = arith.addf %13, %15 : vector<8x4xf32>
    %17 = arith.negf %16 : vector<8x4xf32>
    %18 = math.exp %17 : vector<8x4xf32>
    %cst_15 = arith.constant 1.000000e+00 : f32
    %19 = vector.broadcast %cst_15 : f32 to vector<8x4xf32>
    %20 = arith.addf %19, %18 : vector<8x4xf32>
    %21 = arith.divf %19, %20 : vector<8x4xf32>
    %22 = vector.shape_cast %21 : vector<8x4xf32> to vector<8x4x1xf32>
    %c0_16 = arith.constant 0 : index
    %c0_17 = arith.constant 0 : index
    %c0_18 = arith.constant 0 : index
    %c0_19 = arith.constant 0 : index
    %23 = vector.load %arg2[%c0_16, %c0_17, %c0_18, %c0_19] : memref<1x8x4x64xf32, #tpu.memory_space<vmem>>, vector<1x8x4x64xf32>
    %24 = vector.shape_cast %23 : vector<1x8x4x64xf32> to vector<8x4x64xf32>
    %25 = vector.broadcast %22 : vector<8x4x1xf32> to vector<8x4x64xf32>
    %26 = arith.mulf %24, %25 : vector<8x4x64xf32>
    %c0_20 = arith.constant 0 : index
    %c0_21 = arith.constant 0 : index
    %c0_22 = arith.constant 0 : index
    %c0_23 = arith.constant 0 : index
    %27 = vector.load %arg7[%c0_20, %c0_21, %c0_22, %c0_23] : memref<1x8x4x64xf32, #tpu.memory_space<vmem>>, vector<1x8x4x64xf32>
    %28 = vector.shape_cast %27 : vector<1x8x4x64xf32> to vector<8x4x64xf32>
    %29 = vector.shape_cast %26 : vector<8x4x64xf32> to vector<1x8x4x64xf32>
    tpu.vector_store %arg7[%c0_20, %c0_21, %c0_22, %c0_23], %29 {strides = array<i32>} : memref<1x8x4x64xf32, #tpu.memory_space<vmem>>, vector<1x8x4x64xf32>,
    return
  }
  func.func @transform_0(%arg0: i32, %arg1: i32) -> (i32, i32, i32, i32) {
    %c0_i32 = arith.constant 0 : i32
    %c0_i32_0 = arith.constant 0 : i32
    %c0_i32_1 = arith.constant 0 : i32
    return %arg0, %c0_i32, %arg1, %c0_i32_0 : i32, i32, i32, i32
  }
  func.func @transform_1(%arg0: i32, %arg1: i32) -> (i32, i32) {
    %c0_i32 = arith.constant 0 : i32
    %c0_i32_0 = arith.constant 0 : i32
    %c0_i32_1 = arith.constant 0 : i32
    return %c0_i32, %c0_i32_0 : i32, i32
  }
  func.func @transform_2(%arg0: i32, %arg1: i32) -> (i32, i32) {
    %c0_i32 = arith.constant 0 : i32
    %c0_i32_0 = arith.constant 0 : i32
    %c0_i32_1 = arith.constant 0 : i32
    return %c0_i32, %c0_i32_0 : i32, i32
  }
  func.func @transform_3(%arg0: i32, %arg1: i32) -> (i32, i32) {
    %c0_i32 = arith.constant 0 : i32
    %c0_i32_0 = arith.constant 0 : i32
    %c0_i32_1 = arith.constant 0 : i32
    return %c0_i32, %c0_i32_0 : i32, i32
  }
  func.func @transform_4(%arg0: i32, %arg1: i32) -> (i32, i32) {
    %c0_i32 = arith.constant 0 : i32
    %c0_i32_0 = arith.constant 0 : i32
    %c0_i32_1 = arith.constant 0 : i32
    return %c0_i32, %c0_i32_0 : i32, i32
  }
  func.func @transform_5(%arg0: i32, %arg1: i32) -> (i32, i32, i32, i32) {
    %c0_i32 = arith.constant 0 : i32
    %c0_i32_0 = arith.constant 0 : i32
    %c0_i32_1 = arith.constant 0 : i32
    return %arg0, %c0_i32, %arg1, %c0_i32_0 : i32, i32, i32, i32
  }
}

</mosaic_0001>

<llo_original>
// kernel: tpu_custom_call.1
$region0: #{tpu_custom_call.1}
  #allocation0 [shape = 'u32[]', space=smem, size = 0x4, offset = 0x4, fixed_abs, tag = 'smem constant byte address 0x4 - core index']
  #allocation1 [shape = 'u32[144,128]{1,0:T(1,128)}', space=vmem, size = 0x12000, scoped, tag = 'internal scratch']
  %s0 = inlined_call_operand.hbm [shape: f32[2,8,4,64], index: 0, kind: input, shape index: {}]
  %s1 = inlined_call_operand.vmem [shape: f32[4,8], index: 1, kind: input, shape index: {}]
  %s2 = inlined_call_operand.vmem [shape: f32[4,1], index: 2, kind: input, shape index: {}]
  %s3 = inlined_call_operand.vmem [shape: f32[8,4], index: 3, kind: input, shape index: {}]
  %s4 = inlined_call_operand.vmem [shape: f32[8,1], index: 4, kind: input, shape index: {}]
  %s5 = inlined_call_operand.hbm [shape: f32[2,8,4,64], index: 5, kind: output, shape index: {}]
  %s6 = sld [smem:[#allocation0]]
  $region57: #{tpu_custom_call.1} parent=0
    _
  %s8 = ssub.s32 1, %s6
  %s9 = scalar_select 0, %s8, %s6
  $region1: #{tpu_custom_call.1} parent=0
    #allocation2 [shape = 'u8[32768]{0}', space=vmem, size = 0x8000, scoped, tag = 'input window, operand 0']
    #allocation3 [shape = 's32[2]{0}', space=sflag, size = 0x8, scoped, tag = 'scoped memory for tpu_custom_call.1']
    #allocation4 [shape = 's32[2]{0}', space=sflag, size = 0x8, scoped, tag = 'scoped memory for tpu_custom_call.1']
    #allocation5 [shape = 'u8[32768]{0}', space=vmem, size = 0x8000, scoped, tag = 'output window, operand 0']
    %10 = vsyncpa [#allocation3], 0
    %s11 = scalar_lea.sflag [#allocation3], 1
    %12 = vsyncpa %s11, 0
    %13 = vsyncpa [#allocation4], 0
    %s14 = scalar_lea.sflag [#allocation4], 1
    %15 = vsyncpa %s14, 0
    loop: start=0, step=1, limit=4
    $region2: #{tpu_custom_call.1} parent=1 // loop_pre_header
      _
    $region3: #{tpu_custom_call.1} parent=1 // loop_header
      %s17 = sphi 0, %s21
      %p18 = scmp.ge.s32.totalorder %s17, 4
      %s24 = sphi 0, %s36
      %s25 = sphi 0, %s32
      %s26 = sphi 0, %s24
      %s27 = sphi 0, %s25
      %s28 = sphi 0, %s26
      %s29 = sphi 0, %s27
      %s41 = sphi 0, %s43
      %s44 = sphi 0, %s41
      %s45 = sphi 0, %s44
      %s61 = sphi 0, %s45
      %s65 = sphi 0, %s65
      %s67 = sphi 0, %s65
      %s68 = sphi 0, %s67
      %s82 = sphi 0, %s68
      %s86 = sphi 0, %s86
      %s88 = sphi 0, %s86
      %s89 = sphi 0, %s88
      %s103 = sphi 0, %s89
      %s107 = sphi 0, %s107
      %s109 = sphi 0, %s107
      %s110 = sphi 0, %s109
      %s124 = sphi 0, %s110
      %s128 = sphi 0, %s128
      %s130 = sphi 0, %s128
      %s131 = sphi 0, %s130
      %s145 = sphi 0, %s131
      %s153 = sphi 0, %s155
      %s156 = sphi 0, %s153
      %s157 = sphi 0, %s156
      %s173 = sphi 0, %s157
    $region4: #{tpu_custom_call.1} parent=1 // loop_header_branch
      %20 = sbr.rel (%p18) target = $region8
    $region5: #{tpu_custom_call.1} parent=1 // loop_body
      %s22 = ssub.s32 %s17, 1
      %s23 = ssub.s32 %s17, 2
      %s30 = sadd.s32 1, %s25
      %p31 = scmp.ge.s32.totalorder %s30, 1
      %s32 = scalar_select %p31, 0, %s30
      %s33 = sadd.s32 1, %s24
      %s34 = scalar_select %p31, %s33, %s24
      %p35 = scmp.ge.s32.totalorder %s34, 2
      %s36 = scalar_select %p35, 0, %s34
      %s37 = ssub.s32 %s24, %s36
      %s38 = ssub.s32 %s25, %s32
      %s39 = sor.u32 %s37, %s38
      %p40 = scmp.eq.s32.totalorder %s39, 0
      %s42 = sadd.s32 %s41, 1
      %s43 = scalar_select %p40, %s41, %s42
      %p46 = pneg %p40
      %p47 = scmp.eq.s32.totalorder %s17, 1
      %p48 = por %p46, %p47
      %p49 = scmp.ne.s32.totalorder %s41, %s44
      %p50 = scmp.eq.s32.totalorder %s17, 0
      %p51 = por %p49, %p50
      %p52 = scmp.ne.s32.totalorder %s41, %s44
      %p53 = scmp.eq.s32.totalorder %s22, 1
      %p54 = por %p52, %p53
      %p55 = scmp.ne.s32.totalorder %s44, %s45
      %p56 = scmp.eq.s32.totalorder %s22, 0
      %p57 = por %p55, %p56
      %p58 = scmp.ne.s32.totalorder %s44, %s45
      %p59 = scmp.eq.s32.totalorder %s23, 1
      %p60 = por %p58, %p59
      %p62 = scmp.ne.s32.totalorder %s45, %s61
      %p63 = scmp.eq.s32.totalorder %s23, 0
      %p64 = por %p62, %p63
      %s66 = sadd.s32 %s65, 1
      %p69 = scmp.eq.s32.totalorder %s17, 1
      %p70 = scmp.ne.s32.totalorder %s65, %s67
      %p71 = scmp.eq.s32.totalorder %s17, 0
      %p72 = por %p70, %p71
      %p73 = scmp.ne.s32.totalorder %s65, %s67
      %p74 = scmp.eq.s32.totalorder %s22, 1
      %p75 = por %p73, %p74
      %p76 = scmp.ne.s32.totalorder %s67, %s68
      %p77 = scmp.eq.s32.totalorder %s22, 0
      %p78 = por %p76, %p77
      %p79 = scmp.ne.s32.totalorder %s67, %s68
      %p80 = scmp.eq.s32.totalorder %s23, 1
      %p81 = por %p79, %p80
      %p83 = scmp.ne.s32.totalorder %s68, %s82
      %p84 = scmp.eq.s32.totalorder %s23, 0
      %p85 = por %p83, %p84
      %s87 = sadd.s32 %s86, 1
      %p90 = scmp.eq.s32.totalorder %s17, 1
      %p91 = scmp.ne.s32.totalorder %s86, %s88
      %p92 = scmp.eq.s32.totalorder %s17, 0
      %p93 = por %p91, %p92
      %p94 = scmp.ne.s32.totalorder %s86, %s88
      %p95 = scmp.eq.s32.totalorder %s22, 1
      %p96 = por %p94, %p95
      %p97 = scmp.ne.s32.totalorder %s88, %s89
      %p98 = scmp.eq.s32.totalorder %s22, 0
      %p99 = por %p97, %p98
      %p100 = scmp.ne.s32.totalorder %s88, %s89
      %p101 = scmp.eq.s32.totalorder %s23, 1
      %p102 = por %p100, %p101
      %p104 = scmp.ne.s32.totalorder %s89, %s103
      %p105 = scmp.eq.s32.totalorder %s23, 0
      %p106 = por %p104, %p105
      %s108 = sadd.s32 %s107, 1
      %p111 = scmp.eq.s32.totalorder %s17, 1
      %p112 = scmp.ne.s32.totalorder %s107, %s109
      %p113 = scmp.eq.s32.totalorder %s17, 0
      %p114 = por %p112, %p113
      %p115 = scmp.ne.s32.totalorder %s107, %s109
      %p116 = scmp.eq.s32.totalorder %s22, 1
      %p117 = por %p115, %p116
      %p118 = scmp.ne.s32.totalorder %s109, %s110
      %p119 = scmp.eq.s32.totalorder %s22, 0
      %p120 = por %p118, %p119
      %p121 = scmp.ne.s32.totalorder %s109, %s110
      %p122 = scmp.eq.s32.totalorder %s23, 1
      %p123 = por %p121, %p122
      %p125 = scmp.ne.s32.totalorder %s110, %s124
      %p126 = scmp.eq.s32.totalorder %s23, 0
      %p127 = por %p125, %p126
      %s129 = sadd.s32 %s128, 1
      %p132 = scmp.eq.s32.totalorder %s17, 1
      %p133 = scmp.ne.s32.totalorder %s128, %s130
      %p134 = scmp.eq.s32.totalorder %s17, 0
      %p135 = por %p133, %p134
      %p136 = scmp.ne.s32.totalorder %s128, %s130
      %p137 = scmp.eq.s32.totalorder %s22, 1
      %p138 = por %p136, %p137
      %p139 = scmp.ne.s32.totalorder %s130, %s131
      %p140 = scmp.eq.s32.totalorder %s22, 0
      %p141 = por %p139, %p140
      %p142 = scmp.ne.s32.totalorder %s130, %s131
      %p143 = scmp.eq.s32.totalorder %s23, 1
      %p144 = por %p142, %p143
      %p146 = scmp.ne.s32.totalorder %s131, %s145
      %p147 = scmp.eq.s32.totalorder %s23, 0
      %p148 = por %p146, %p147
      %s149 = ssub.s32 %s24, %s36
      %s150 = ssub.s32 %s25, %s32
      %s151 = sor.u32 %s149, %s150
      %p152 = scmp.eq.s32.totalorder %s151, 0
      %s154 = sadd.s32 %s153, 1
      %s155 = scalar_select %p152, %s153, %s154
      %p158 = pneg %p152
      %p159 = scmp.eq.s32.totalorder %s17, 1
      %p160 = por %p158, %p159
      %p161 = scmp.ne.s32.totalorder %s153, %s156
      %p162 = scmp.eq.s32.totalorder %s17, 0
      %p163 = por %p161, %p162
      %p164 = scmp.ne.s32.totalorder %s153, %s156
      %p165 = scmp.eq.s32.totalorder %s22, 1
      %p166 = por %p164, %p165
      %p167 = scmp.ne.s32.totalorder %s156, %s157
      %p168 = scmp.eq.s32.totalorder %s22, 0
      %p169 = por %p167, %p168
      %p170 = scmp.ne.s32.totalorder %s156, %s157
      %p171 = scmp.eq.s32.totalorder %s23, 1
      %p172 = por %p170, %p171
      %p174 = scmp.ne.s32.totalorder %s157, %s173
      %p175 = scmp.eq.s32.totalorder %s23, 0
      %p176 = por %p174, %p175
      %p177 = scmp.le.s32.totalorder 1, %s17
      %p178 = scmp.lt.s32.totalorder %s17, 3
      %p179 = pnand %p177, %p178
      %p180 = pneg %p179
      // Predicated region
      $region9: #{tpu_custom_call.1} parent=5 // pred_check
        _
      $region10: #{tpu_custom_call.1} parent=5 // pred_check_branch
        %182 = sbr.rel (%p179) target = $region12
      $region11: #{tpu_custom_call.1} parent=5 // pred_region
        %s183 = ssub.s32 %s17, 1
        // Predicated region
        $region13: #{tpu_custom_call.1} parent=11 // pred_check
          %p184 = pneg %p78
        $region14: #{tpu_custom_call.1} parent=11 // pred_check_branch
          %186 = sbr.rel (%p184) target = $region16
        $region15: #{tpu_custom_call.1} parent=11 // pred_region
          _
        $region16: #{tpu_custom_call.1} parent=11 // pred_fallthru
          _
        // Predicated region
        $region17: #{tpu_custom_call.1} parent=11 // pred_check
          %p187 = pneg %p99
        $region18: #{tpu_custom_call.1} parent=11 // pred_check_branch
          %189 = sbr.rel (%p187) target = $region20
        $region19: #{tpu_custom_call.1} parent=11 // pred_region
          _
        $region20: #{tpu_custom_call.1} parent=11 // pred_fallthru
          _
        // Predicated region
        $region21: #{tpu_custom_call.1} parent=11 // pred_check
          %p190 = pneg %p120
        $region22: #{tpu_custom_call.1} parent=11 // pred_check_branch
          %192 = sbr.rel (%p190) target = $region24
        $region23: #{tpu_custom_call.1} parent=11 // pred_region
          _
        $region24: #{tpu_custom_call.1} parent=11 // pred_fallthru
          _
        // Predicated region
        $region25: #{tpu_custom_call.1} parent=11 // pred_check
          %p193 = pneg %p141
        $region26: #{tpu_custom_call.1} parent=11 // pred_check_branch
          %195 = sbr.rel (%p193) target = $region28
        $region27: #{tpu_custom_call.1} parent=11 // pred_region
          _
        $region28: #{tpu_custom_call.1} parent=11 // pred_fallthru
          _
      $region12: #{tpu_custom_call.1} parent=5 // pred_fallthru
        _
      %p196 = scmp.lt.s32.totalorder %s17, 2
      // Predicated region
      $region29: #{tpu_custom_call.1} parent=5 // pred_check
        %p197 = pneg %p196
      $region30: #{tpu_custom_call.1} parent=5 // pred_check_branch
        %199 = sbr.rel (%p197) target = $region32
      $region31: #{tpu_custom_call.1} parent=5 // pred_region
        // Predicated region
        $region33: #{tpu_custom_call.1} parent=31 // pred_check
          %p200 = pneg %p51
        $region34: #{tpu_custom_call.1} parent=31 // pred_check_branch
          %202 = sbr.rel (%p200) target = $region36
        $region35: #{tpu_custom_call.1} parent=31 // pred_region
          %s203 = sand.u32 %s41, 1
          %s204 = scalar_lea.sflag [#allocation3], %s203
          %s205 = sand.u32 %s41, 1
          %s206 = smul.addr %s205, 32
          %s207 = scalar_lea.vmem [#allocation2], %s206
          %s209 = ssub.s32 512, 512
          %210 = vsyncadd %s204, %s209
          %s211 = smul.addr %s24, 8
          %s212 = sadd.s32 %s25, %s211
          %s213 = smul.addr %s212, 64
          %s214 = scalar_lea.hbm %s0, %s213
          %s215 = sshll.u32 %s207, 4
          %s216 = int_to_ptr.vmem [resolvable:$true] %s215
          %221 = dma.hbm_to_vmem [thread:$0]  %s214, 512, %s216, %s204, 64, 64, 4
        $region36: #{tpu_custom_call.1} parent=31 // pred_fallthru
          _
      $region32: #{tpu_custom_call.1} parent=5 // pred_fallthru
        _
      %p222 = scmp.le.s32.totalorder 1, %s17
      %p223 = scmp.lt.s32.totalorder %s17, 3
      %p224 = pnand %p222, %p223
      %p225 = pneg %p224
      // Predicated region
      $region37: #{tpu_custom_call.1} parent=5 // pred_check
        _
      $region38: #{tpu_custom_call.1} parent=5 // pred_check_branch
        %227 = sbr.rel (%p224) target = $region40
      $region39: #{tpu_custom_call.1} parent=5 // pred_region
        %s228 = ssub.s32 %s17, 1
        %s229 = sand.u32 %s44, 1
        %s230 = scalar_lea.sflag [#allocation3], %s229
        %s231 = sand.u32 %s44, 1
        %s232 = smul.addr %s231, 32
        %s233 = scalar_lea.vmem [#allocation2], %s232
        // Predicated region
        $region41: #{tpu_custom_call.1} parent=39 // pred_check
          %p234 = pneg %p57
        $region42: #{tpu_custom_call.1} parent=39 // pred_check_branch
          %236 = sbr.rel (%p234) target = $region44
        $region43: #{tpu_custom_call.1} parent=39 // pred_region
          %237 = dma.done %s230, 512
        $region44: #{tpu_custom_call.1} parent=39 // pred_fallthru
          _
        %s238 = sand.u32 %s44, 1
        %s239 = scalar_lea.sflag [#allocation3], %s238
        %s240 = sand.u32 %s44, 1
        %s241 = smul.addr %s240, 32
        %s242 = scalar_lea.vmem [#allocation2], %s241
        %p243 = pneg %p57
        %p244 = pneg %p54
        %p245 = pneg %p78
        %p246 = pneg %p75
        %p247 = pneg %p99
        %p248 = pneg %p96
        %p249 = pneg %p120
        %p250 = pneg %p117
        %p251 = pneg %p141
        %p252 = pneg %p138
        %p253 = pneg %p169
        %p254 = pneg %p166
        %s255 = sand.u32 %s156, 1
        %s256 = scalar_lea.sflag [#allocation4], %s255
        %s257 = sand.u32 %s156, 1
        %s258 = smul.addr %s257, 32
        %s259 = scalar_lea.vmem [#allocation5], %s258
        %v260 = vld [vmem:[%s233] sm:$0xf]
        %v261 = vld [vmem:[%s233 + $0x4] sm:$0xf]
        %v262 = vld [vmem:[%s233 + $0x8] sm:$0xf]
        %v263 = vld [vmem:[%s233 + $0xc] sm:$0xf]
        %v264 = vld [vmem:[%s233 + $0x10] sm:$0xf]
        %v265 = vld [vmem:[%s233 + $0x14] sm:$0xf]
        %v266 = vld [vmem:[%s233 + $0x18] sm:$0xf]
        %v267 = vld [vmem:[%s233 + $0x1c] sm:$0xf]
        %vm268 = vcmask 519168
        %v269 = vsel %vm268, %v260, 0.0
        %270 = vadd.xlane.f32.xlu0 %v269
        %v271 = vpop.xlane.xlu0 %270
        %v272 = vsel %vm268, %v261, 0.0
        %273 = vadd.xlane.f32.xlu0 %v272
        %v274 = vpop.xlane.xlu0 %273
        %v275 = vsel %vm268, %v262, 0.0
        %276 = vadd.xlane.f32.xlu0 %v275
        %v277 = vpop.xlane.xlu0 %276
        %v278 = vsel %vm268, %v263, 0.0
        %279 = vadd.xlane.f32.xlu0 %v278
        %v280 = vpop.xlane.xlu0 %279
        %v281 = vsel %vm268, %v264, 0.0
        %282 = vadd.xlane.f32.xlu0 %v281
        %v283 = vpop.xlane.xlu0 %282
        %v284 = vsel %vm268, %v265, 0.0
        %285 = vadd.xlane.f32.xlu0 %v284
        %v286 = vpop.xlane.xlu0 %285
        %v287 = vsel %vm268, %v266, 0.0
        %288 = vadd.xlane.f32.xlu0 %v287
        %v289 = vpop.xlane.xlu0 %288
        %v290 = vsel %vm268, %v267, 0.0
        %291 = vadd.xlane.f32.xlu0 %v290
        %v292 = vpop.xlane.xlu0 %291
        %v293 = vrcp.pop 64.0
        %v294 = vmul.f32 %v271, %v293
        %v295 = vmul.f32 %v274, %v293
        %v296 = vmul.f32 %v277, %v293
        %v297 = vmul.f32 %v280, %v293
        %v298 = vmul.f32 %v283, %v293
        %v299 = vmul.f32 %v286, %v293
        %v300 = vmul.f32 %v289, %v293
        %v301 = vmul.f32 %v292, %v293
        %v302 = vld [vmem:[%s1] sm:$0xf]
        %v303 = vld [vmem:[%s2] sm:$0xf]
        %305 = vset.pattern.permute.xlu0 0
        %306 = vperm.xlu0 %305, %v303
        %v307 = vpop.permute.xlu0 %306
        %v317 = vlaneseq
        %v318 = vand.u32 %v317, 127
        %v319 = vlaneseq
        %v320 = vshrl.u32 %v319, 7
        %v321 = vsub.s32 %v318, %v320
        %v322 = vrot.slane %v294, %v321
        %v323 = vlaneseq
        %v324 = vshrl.u32 %v323, 7
        %v325 = vsub.s32 %v318, %v324
        %v326 = vrot.slane %v295, %v325
        %v327 = vlaneseq
        %v328 = vshrl.u32 %v327, 7
        %v329 = vsub.s32 %v318, %v328
        %v330 = vrot.slane %v296, %v329
        %v331 = vlaneseq
        %v332 = vshrl.u32 %v331, 7
        %v333 = vsub.s32 %v318, %v332
        %v334 = vrot.slane %v297, %v333
        %v335 = vlaneseq
        %v336 = vshrl.u32 %v335, 7
        %v337 = vsub.s32 %v318, %v336
        %v338 = vrot.slane %v298, %v337
        %v339 = vlaneseq
        %v340 = vshrl.u32 %v339, 7
        %v341 = vsub.s32 %v318, %v340
        %v342 = vrot.slane %v299, %v341
        %v343 = vlaneseq
        %v344 = vshrl.u32 %v343, 7
        %v345 = vsub.s32 %v318, %v344
        %v346 = vrot.slane %v300, %v345
        %v347 = vlaneseq
        %v348 = vshrl.u32 %v347, 7
        %v349 = vsub.s32 %v318, %v348
        %v350 = vrot.slane %v301, %v349
        %vm351 = vcmask 1041409
        %v352 = vsel %vm351, %v326, %v322
        %vm353 = vcmask 1042434
        %v354 = vsel %vm353, %v330, %v352
        %vm355 = vcmask 1043459
        %v356 = vsel %vm355, %v334, %v354
        %vm357 = vcmask 1044484
        %v358 = vsel %vm357, %v338, %v356
        %vm359 = vcmask 1045509
        %v360 = vsel %vm359, %v342, %v358
        %vm361 = vcmask 1046534
        %v362 = vsel %vm361, %v346, %v360
        %vm363 = vcmask 1047559
        %v364 = vsel %vm363, %v350, %v362
        %vm366 = vcmask 64512
        %v368 = vsel %vm366, %v302, 0
        %370 = vmatprep.subr.mxu0 0.0
        %371 = vmatpush1.msra.mxu0 %v364
        %372 = vmatprep.subr.mxu0 0.0
        %373 = vmatpush1.msra.mxu0 0.0
        %374 = vmatprep.subr.mxu0 0.0
        %375 = vmatpush1.msra.mxu0 0.0
        %376 = vmatprep.subr.mxu0 0.0
        %377 = vmatpush1.msra.mxu0 0.0
        %378 = vmatprep.subr.mxu0 0.0
        %379 = vmatpush1.msra.mxu0 0.0
        %380 = vmatprep.subr.mxu0 0.0
        %381 = vmatpush1.msra.mxu0 0.0
        %382 = vmatprep.subr.mxu0 0.0
        %383 = vmatpush1.msra.mxu0 0.0
        %384 = vmatprep.subr.mxu0 0.0
        %385 = vmatpush1.msra.mxu0 0.0
        %386 = vmatprep.subr.mxu0 0.0
        %387 = vmatpush1.msra.mxu0 0.0
        %388 = vmatprep.subr.mxu0 0.0
        %389 = vmatpush1.msra.mxu0 0.0
        %390 = vmatprep.subr.mxu0 0.0
        %391 = vmatpush1.msra.mxu0 0.0
        %392 = vmatprep.subr.mxu0 0.0
        %393 = vmatpush1.msra.mxu0 0.0
        %394 = vmatprep.subr.mxu0 0.0
        %395 = vmatpush1.msra.mxu0 0.0
        %396 = vmatprep.subr.mxu0 0.0
        %397 = vmatpush1.msra.mxu0 0.0
        %398 = vmatprep.subr.mxu0 0.0
        %399 = vmatpush1.msra.mxu0 0.0
        %400 = vmatprep.subr.mxu0 0.0
        %401 = vmatpush1.msra.mxu0 0.0
        %402 = vmatprep.subr.mxu0 0.0
        %403 = vmatpush1.msra.mxu0 0.0
        %404 = vmatprep.subr.mxu0 0.0
        %405 = vmatpush1.msra.mxu0 0.0
        %406 = vmatprep.subr.mxu0 0.0
        %407 = vmatpush1.msra.mxu0 0.0
        %408 = vmatprep.subr.mxu0 0.0
        %409 = vmatpush1.msra.mxu0 0.0
        %410 = vmatprep.subr.mxu0 0.0
        %411 = vmatpush1.msra.mxu0 0.0
        %412 = vmatprep.subr.mxu0 0.0
        %413 = vmatpush1.msra.mxu0 0.0
        %414 = vmatprep.subr.mxu0 0.0
        %415 = vmatpush1.msra.mxu0 0.0
        %416 = vmatprep.subr.mxu0 0.0
        %417 = vmatpush1.msra.mxu0 0.0
        %418 = vmatprep.subr.mxu0 0.0
        %419 = vmatpush1.msra.mxu0 0.0
        %420 = vmatprep.subr.mxu0 0.0
        %421 = vmatpush1.msra.mxu0 0.0
        %422 = vmatprep.subr.mxu0 0.0
        %423 = vmatpush1.msra.mxu0 0.0
        %424 = vmatprep.subr.mxu0 0.0
        %425 = vmatpush1.msra.mxu0 0.0
        %426 = vmatprep.subr.mxu0 0.0
        %427 = vmatpush1.msra.mxu0 0.0
        %428 = vmatprep.subr.mxu0 0.0
        %429 = vmatpush1.msra.mxu0 0.0
        %430 = vmatprep.subr.mxu0 0.0
        %431 = vmatpush1.msra.mxu0 0.0
        %432 = vmatprep.subr.mxu0 0.0
        %433 = vmatpush1.msra.mxu0 0.0
        %434 = vmatprep.mubr.f32.mxu0 0.0
        %435 = vmatmul.mubr.f32.gmra.mrb[0].mxu0 %v368
        %v436 = vpop.f32.mrb[0].mxu0
        %v437 = vadd.f32 %v307, %v436
        %v438 = vpop.f32.mrb[0].mxu0
        %439 = vdwg.mxu0
        %v440 = vmax.f32 %v437, 0.0
        %v441 = vld [vmem:[%s3] sm:$0xff]
        %v442 = vld [vmem:[%s4] sm:$0xff]
        %444 = vset.pattern.permute.xlu0 0
        %445 = vperm.xlu0 %444, %v442
        %v446 = vpop.permute.xlu0 %445
        %vm448 = vcmask 31744
        %v450 = vsel %vm448, %v441, 0
        %vm452 = vcmask 1043456
        %v454 = vsel %vm452, %v440, 0
        %456 = vmatprep.subr.mxu0 0.0
        %457 = vmatpush1.msra.mxu0 %v454
        %458 = vmatprep.subr.mxu0 0.0
        %459 = vmatpush1.msra.mxu0 0.0
        %460 = vmatprep.subr.mxu0 0.0
        %461 = vmatpush1.msra.mxu0 0.0
        %462 = vmatprep.subr.mxu0 0.0
        %463 = vmatpush1.msra.mxu0 0.0
        %464 = vmatprep.subr.mxu0 0.0
        %465 = vmatpush1.msra.mxu0 0.0
        %466 = vmatprep.subr.mxu0 0.0
        %467 = vmatpush1.msra.mxu0 0.0
        %468 = vmatprep.subr.mxu0 0.0
        %469 = vmatpush1.msra.mxu0 0.0
        %470 = vmatprep.subr.mxu0 0.0
        %471 = vmatpush1.msra.mxu0 0.0
        %472 = vmatprep.subr.mxu0 0.0
        %473 = vmatpush1.msra.mxu0 0.0
        %474 = vmatprep.subr.mxu0 0.0
        %475 = vmatpush1.msra.mxu0 0.0
        %476 = vmatprep.subr.mxu0 0.0
        %477 = vmatpush1.msra.mxu0 0.0
        %478 = vmatprep.subr.mxu0 0.0
        %479 = vmatpush1.msra.mxu0 0.0
        %480 = vmatprep.subr.mxu0 0.0
        %481 = vmatpush1.msra.mxu0 0.0
        %482 = vmatprep.subr.mxu0 0.0
        %483 = vmatpush1.msra.mxu0 0.0
        %484 = vmatprep.subr.mxu0 0.0
        %485 = vmatpush1.msra.mxu0 0.0
        %486 = vmatprep.subr.mxu0 0.0
        %487 = vmatpush1.msra.mxu0 0.0
        %488 = vmatprep.subr.mxu0 0.0
        %489 = vmatpush1.msra.mxu0 0.0
        %490 = vmatprep.subr.mxu0 0.0
        %491 = vmatpush1.msra.mxu0 0.0
        %492 = vmatprep.subr.mxu0 0.0
        %493 = vmatpush1.msra.mxu0 0.0
        %494 = vmatprep.subr.mxu0 0.0
        %495 = vmatpush1.msra.mxu0 0.0
        %496 = vmatprep.subr.mxu0 0.0
        %497 = vmatpush1.msra.mxu0 0.0
        %498 = vmatprep.subr.mxu0 0.0
        %499 = vmatpush1.msra.mxu0 0.0
        %500 = vmatprep.subr.mxu0 0.0
        %501 = vmatpush1.msra.mxu0 0.0
        %502 = vmatprep.subr.mxu0 0.0
        %503 = vmatpush1.msra.mxu0 0.0
        %504 = vmatprep.subr.mxu0 0.0
        %505 = vmatpush1.msra.mxu0 0.0
        %506 = vmatprep.subr.mxu0 0.0
        %507 = vmatpush1.msra.mxu0 0.0
        %508 = vmatprep.subr.mxu0 0.0
        %509 = vmatpush1.msra.mxu0 0.0
        %510 = vmatprep.subr.mxu0 0.0
        %511 = vmatpush1.msra.mxu0 0.0
        %512 = vmatprep.subr.mxu0 0.0
        %513 = vmatpush1.msra.mxu0 0.0
        %514 = vmatprep.subr.mxu0 0.0
        %515 = vmatpush1.msra.mxu0 0.0
        %516 = vmatprep.subr.mxu0 0.0
        %517 = vmatpush1.msra.mxu0 0.0
        %518 = vmatprep.subr.mxu0 0.0
        %519 = vmatpush1.msra.mxu0 0.0
        %520 = vmatprep.mubr.f32.mxu0 0.0
        %521 = vmatmul.mubr.f32.gmra.mrb[0].mxu0 %v450
        %v522 = vpop.f32.mrb[0].mxu0
        %v523 = vadd.f32 %v446, %v522
        %v524 = vpop.f32.mrb[0].mxu0
        %525 = vdwg.mxu0
        %v526 = vxor.u32 %v523, 2147483648
        %v527 = vmul.f32 %v526, 1.442695
        %v528 = vpow.pop %v527
        %v529 = vadd.f32 %v528, 1.0
        %v530 = vrcp.pop %v529
        %v531 = vmul.f32 1.0, %v530
        %v532 = vlaneseq
        %v533 = vshrl.u32 %v532, 7
        %v534 = vsub.s32 0, %v533
        %v535 = vrot.slane %v531, %v534
        %537 = vbcast.lane.b32.xlu0 %v535, 256
        %v538 = vpop.permute.xlu0 %537
        %v539 = vlaneseq
        %v540 = vshrl.u32 %v539, 7
        %v541 = vsub.s32 1, %v540
        %v542 = vrot.slane %v531, %v541
        %544 = vbcast.lane.b32.xlu0 %v542, 256
        %v545 = vpop.permute.xlu0 %544
        %v546 = vlaneseq
        %v547 = vshrl.u32 %v546, 7
        %v548 = vsub.s32 2, %v547
        %v549 = vrot.slane %v531, %v548
        %551 = vbcast.lane.b32.xlu0 %v549, 256
        %v552 = vpop.permute.xlu0 %551
        %v553 = vlaneseq
        %v554 = vshrl.u32 %v553, 7
        %v555 = vsub.s32 3, %v554
        %v556 = vrot.slane %v531, %v555
        %558 = vbcast.lane.b32.xlu0 %v556, 256
        %v559 = vpop.permute.xlu0 %558
        %v560 = vlaneseq
        %v561 = vshrl.u32 %v560, 7
        %v562 = vsub.s32 4, %v561
        %v563 = vrot.slane %v531, %v562
        %565 = vbcast.lane.b32.xlu0 %v563, 256
        %v566 = vpop.permute.xlu0 %565
        %v567 = vlaneseq
        %v568 = vshrl.u32 %v567, 7
        %v569 = vsub.s32 5, %v568
        %v570 = vrot.slane %v531, %v569
        %572 = vbcast.lane.b32.xlu0 %v570, 256
        %v573 = vpop.permute.xlu0 %572
        %v574 = vlaneseq
        %v575 = vshrl.u32 %v574, 7
        %v576 = vsub.s32 6, %v575
        %v577 = vrot.slane %v531, %v576
        %579 = vbcast.lane.b32.xlu0 %v577, 256
        %v580 = vpop.permute.xlu0 %579
        %v581 = vlaneseq
        %v582 = vshrl.u32 %v581, 7
        %v583 = vsub.s32 7, %v582
        %v584 = vrot.slane %v531, %v583
        %586 = vbcast.lane.b32.xlu0 %v584, 256
        %v587 = vpop.permute.xlu0 %586
        %v588 = vmul.f32 %v260, %v538
        %v589 = vmul.f32 %v261, %v545
        %v590 = vmul.f32 %v262, %v552
        %v591 = vmul.f32 %v263, %v559
        %v592 = vmul.f32 %v264, %v566
        %v593 = vmul.f32 %v265, %v573
        %v594 = vmul.f32 %v266, %v580
        %v595 = vmul.f32 %v267, %v587
        %596 = vst.msk [vmem:[%s259] sm:$0xf] %vm268, %v588
        %597 = vst.msk [vmem:[%s259 + $0x4] sm:$0xf] %vm268, %v589
        %598 = vst.msk [vmem:[%s259 + $0x8] sm:$0xf] %vm268, %v590
        %599 = vst.msk [vmem:[%s259 + $0xc] sm:$0xf] %vm268, %v591
        %600 = vst.msk [vmem:[%s259 + $0x10] sm:$0xf] %vm268, %v592
        %601 = vst.msk [vmem:[%s259 + $0x14] sm:$0xf] %vm268, %v593
        %602 = vst.msk [vmem:[%s259 + $0x18] sm:$0xf] %vm268, %v594
        %603 = vst.msk [vmem:[%s259 + $0x1c] sm:$0xf] %vm268, %v595
        %s604 = sand.u32 %s156, 1
        %s605 = scalar_lea.sflag [#allocation4], %s604
        %s606 = sand.u32 %s156, 1
        %s607 = smul.addr %s606, 32
        %s608 = scalar_lea.vmem [#allocation5], %s607
        // Predicated region
        $region45: #{tpu_custom_call.1} parent=39 // pred_check
          %p609 = pneg %p166
        $region46: #{tpu_custom_call.1} parent=39 // pred_check_branch
          %611 = sbr.rel (%p609) target = $region48
        $region47: #{tpu_custom_call.1} parent=39 // pred_region
          %s613 = ssub.s32 512, 512
          %614 = vsyncadd %s605, %s613
          %s615 = smul.addr %s26, 8
          %s616 = sadd.s32 %s27, %s615
          %s617 = smul.addr %s616, 64
          %s618 = scalar_lea.hbm %s5, %s617
          %s619 = sshll.u32 %s608, 4
          %s620 = int_to_ptr.vmem [resolvable:$true] %s619
          %625 = dma.vmem_to_hbm [thread:$0]  %s620, 512, %s618, %s605, 64, 64, 4
        $region48: #{tpu_custom_call.1} parent=39 // pred_fallthru
          _
      $region40: #{tpu_custom_call.1} parent=5 // pred_fallthru
        _
      %p626 = scmp.le.s32.totalorder 2, %s17
      // Predicated region
      $region49: #{tpu_custom_call.1} parent=5 // pred_check
        %p627 = pneg %p626
      $region50: #{tpu_custom_call.1} parent=5 // pred_check_branch
        %629 = sbr.rel (%p627) target = $region52
      $region51: #{tpu_custom_call.1} parent=5 // pred_region
        %s630 = ssub.s32 %s17, 2
        // Predicated region
        $region53: #{tpu_custom_call.1} parent=51 // pred_check
          %p631 = pneg %p172
        $region54: #{tpu_custom_call.1} parent=51 // pred_check_branch
          %633 = sbr.rel (%p631) target = $region56
        $region55: #{tpu_custom_call.1} parent=51 // pred_region
          %s634 = sand.u32 %s157, 1
          %s635 = scalar_lea.sflag [#allocation4], %s634
          %s636 = sand.u32 %s157, 1
          %s637 = smul.addr %s636, 32
          %s638 = scalar_lea.vmem [#allocation5], %s637
          %639 = dma.done %s635, 512
        $region56: #{tpu_custom_call.1} parent=51 // pred_fallthru
          _
      $region52: #{tpu_custom_call.1} parent=5 // pred_fallthru
        _
    $region6: #{tpu_custom_call.1} parent=1 // loop_footer
      %s21 = sadd.s32 1, %s17
    $region7: #{tpu_custom_call.1} parent=1 // loop_footer_branch
      %16 = sbr.rel target = $region3
    $region8: #{tpu_custom_call.1} parent=1 // loop_exit
      _
    %640 = vsyncpa [#allocation3], 1
    %s641 = scalar_lea.sflag [#allocation3], 1
    %642 = vsyncpa %s641, 1
    %643 = vsyncpa [#allocation4], 1
    %s644 = scalar_lea.sflag [#allocation4], 1
    %645 = vsyncpa %s644, 1

</llo_original>
